<compile_context>
chip_gen: v7x
topology: tpu7x:2x2x1
jax: 0.10.0
libtpu: 0.0.40
codegen_flags: <defaults>
</compile_context>

<pallas_src>
import functools

import jax
import jax.numpy as jnp
from jax import lax
from jax.experimental import pallas as pl
from jax.experimental.pallas import tpu as pltpu


def _vmem_capacity_bytes():
    """Physical VMEM of the current TPU generation (conservative fallback)."""
    try:
        return int(pltpu.get_tpu_info().vmem_capacity_bytes)
    except Exception:
        return 64 << 20  # v7x per-TensorCore VMEM (most restrictive)


def _pick_channel_block(n, c, h, w, in_itemsize, vmem_cap):
    """Largest divisor of c such that the input block hits ~vmem_cap/16
    (8 MiB on 128 MiB parts, 4 MiB on v7x) while keeping >= 4 grid steps for
    pipelining and for both v7x TensorCores."""
    input_budget = max(1 << 20, min(8 << 20, vmem_cap // 16))
    plane = max(h * w * in_itemsize, 1)
    cb = int(max(1, min(c, input_budget // plane)))
    while c % cb:
        cb -= 1
    min_steps = min(4, n * c)
    while cb > 1 and n * (c // cb) < min_steps:
        cb -= 1
        while c % cb:
            cb -= 1
    return cb


def _vmem_limit_bytes(cb, h, w, m, in_itemsize, out_itemsize, vmem_cap):
    """Scoped-VMEM request: double-buffered in/out + scratch + f32 temps."""
    blk = cb * h * w
    io = 2 * blk * in_itemsize + 2 * blk * out_itemsize
    scratch = cb * (h + 2 * m) * w * 4
    temps = 4 * blk * 4            # f32 intermediates (t, acc, loads, clip)
    limit = io + scratch + temps + (2 << 20)   # slack for compiler scratch
    return int(min(max(limit, 32 << 20), int(0.9 * vmem_cap)))


def _box_sum_lanes(t, k):
    """k-wide box sum with replicate (edge-clamped) boundary along the lane
    (last) axis, using XLU rolls + where-masked edge fix-up (no concatenate,
    no lane-misaligned slices)."""
    w = t.shape[-1]
    m = (k - 1) // 2
    if m == 0:
        return t
    lane = lax.broadcasted_iota(jnp.int32, t.shape, t.ndim - 1)
    left = t[..., 0:1]          # first column (broadcasts over lanes)
    right = t[..., w - 1:w]     # last column
    acc = t
    # TODO(synk): for large k (>= ~9) an MXU banded all-ones matmul over the
    # (CB*H, W) slab would offload these adds to the otherwise-idle MXU slot.
    for s in range(1, m + 1):
        if s >= w:
            # every access clamps to an edge column
            acc = acc + jnp.broadcast_to(right, t.shape)
            acc = acc + jnp.broadcast_to(left, t.shape)
        else:
            r = pltpu.roll(t, shift=(w - s) % w, axis=t.ndim - 1)  # t[j + s]
            r = jnp.where(lane <= (w - 1 - s), r, right)
            l = pltpu.roll(t, shift=s, axis=t.ndim - 1)            # t[j - s]
            l = jnp.where(lane >= s, l, left)
            acc = acc + r + l
    return acc


def _dilate_kernel(x_ref, o_ref, tmp_ref, *, k):
    # x_ref / o_ref: (1, CB, H, W) blocks (W on lanes, H on sublanes).
    # tmp_ref:       (CB, H + 2m, W) f32 VMEM scratch for the H pass.
    m = (k - 1) // 2
    cb, h, w = x_ref.shape[1], x_ref.shape[2], x_ref.shape[3]

    t = (1.0 - x_ref[0].astype(jnp.float32)) * 0.5      # (CB, H, W)

    # ---- W pass: edge-clamped k-tap box sum along lanes (XLU rolls) ----
    ws = _box_sum_lanes(t, k)

    # ---- stage W-sums plus replicated edge rows into VMEM scratch ----
    tmp_ref[:, pl.ds(m, h), :] = ws
    if m > 0:
        top = ws[:, 0:1, :]
        bot = ws[:, h - 1:h, :]
        tmp_ref[:, pl.ds(0, m), :] = jnp.broadcast_to(top, (cb, m, w))
        tmp_ref[:, pl.ds(m + h, m), :] = jnp.broadcast_to(bot, (cb, m, w))

    # ---- H pass: k static row-offset loads from scratch (load slots) ----
    y = tmp_ref[:, pl.ds(0, h), :]
    for s in range(1, k):
        y = y + tmp_ref[:, pl.ds(s, h), :]

    o_ref[0] = (1.0 - 2.0 * jnp.clip(y, 0.0, 1.0)).astype(o_ref.dtype)


def my_dilate(x, kernel_size):
    """x: (N, C, H, W); all-ones depthwise k x k 'dilate' with replicate pad."""
    n, c, h, w = x.shape
    k = int(kernel_size)
    assert k >= 1 and (k - 1) % 2 == 0, \
        "kernel_size must be odd (integer replicate pad)"
    m = (k - 1) // 2

    # TODO(synk): a single (H, W) plane too large for VMEM even at cb=1 (e.g.
    # 4Kx4K f32) would need H-blocking with (k-1)-row replicate halos; not
    # required for typical image sizes handled by this module.
    vmem_cap = _vmem_capacity_bytes()
    cb = _pick_channel_block(n, c, h, w, x.dtype.itemsize, vmem_cap)
    vmem_limit = _vmem_limit_bytes(cb, h, w, m, x.dtype.itemsize,
                                   x.dtype.itemsize, vmem_cap)

    kernel = functools.partial(_dilate_kernel, k=k)
    bytes_accessed = int(2 * n * c * h * w * x.dtype.itemsize)
    flops = int(2 * k * n * c * h * w)

    return pl.pallas_call(
        kernel,
        out_shape=jax.ShapeDtypeStruct((n, c, h, w), x.dtype),
        grid_spec=pltpu.PrefetchScalarGridSpec(
            num_scalar_prefetch=0,
            grid=(n, c // cb),
            in_specs=[pl.BlockSpec((1, cb, h, w), lambda i, j: (i, j, 0, 0))],
            out_specs=pl.BlockSpec((1, cb, h, w), lambda i, j: (i, j, 0, 0)),
            scratch_shapes=[pltpu.VMEM((cb, h + 2 * m, w), jnp.float32)],
        ),
        compiler_params=pltpu.CompilerParams(
            dimension_semantics=("parallel", "parallel"),
            vmem_limit_bytes=vmem_limit),
        cost_estimate=pl.CostEstimate(
            flops=flops, transcendentals=0, bytes_accessed=bytes_accessed),
    )(x)


def _reference(x, kernel_size):
    """Pure-JAX reference (replicate pad + depthwise ones conv)."""
    k = kernel_size
    m = (k - 1) // 2
    c = x.shape[1]
    t = (1.0 - x) * 0.5
    t = jnp.pad(t, ((0, 0), (0, 0), (m, m), (m, m)), mode="edge")
    wgt = jnp.ones((c, 1, k, k), x.dtype)
    y = lax.conv_general_dilated(
        t, wgt, window_strides=(1, 1), padding="VALID",
        dimension_numbers=("NCHW", "OIHW", "NCHW"),
        feature_group_count=c)
    return 1.0 - 2.0 * jnp.clip(y, 0.0, 1.0)


if __name__ == "__main__":
    kernel_size = 5      # odd -> integer replicate pad (see note above)
    channels = 4

    key = jax.random.PRNGKey(0)
    x = jax.random.uniform(key, (2, channels, 16, 16), dtype=jnp.float32)

    out = jax.block_until_ready(my_dilate(x, kernel_size))
    ref = jax.block_until_ready(_reference(x, kernel_size))

    assert out.shape == x.shape
    assert jnp.max(jnp.abs(out - ref)) < 1e-5

    print("KERNEL_OK")
</pallas_src>

<mosaic_0001>
module attributes {stable_mosaic.version = 11 : i64} {
  func.func @_dilate_kernel(%arg0: i32, %arg1: i32, %arg2: memref<1x2x16x16xf32, #tpu.memory_space<vmem>>, %arg3: memref<1x2x16x16xf32, #tpu.memory_space<vmem>>, %arg4: memref<2x20x16xf32, #tpu.memory_space<vmem>>) attributes {dimension_semantics = [#tpu.dimension_semantics<parallel>, #tpu.dimension_semantics<parallel>], iteration_bounds = array<i64: 2, 2>, scalar_prefetch = 0 : i64, scratch_operands = 1 : i64, tpu.core_type = #tpu.core_type<tc>, window_params = [{transform_indices = @transform_0, window_bounds = array<i64: 1, 2, 16, 16>}, {transform_indices = @transform_1, window_bounds = array<i64: 1, 2, 16, 16>}]} {
    %c0 = arith.constant 0 : index
    %c0_0 = arith.constant 0 : index
    %c0_1 = arith.constant 0 : index
    %c0_2 = arith.constant 0 : index
    %0 = vector.load %arg2[%c0, %c0_0, %c0_1, %c0_2] : memref<1x2x16x16xf32, #tpu.memory_space<vmem>>, vector<1x2x16x16xf32>
    %1 = vector.shape_cast %0 : vector<1x2x16x16xf32> to vector<2x16x16xf32>
    %cst = arith.constant 1.000000e+00 : f32
    %2 = vector.broadcast %cst : f32 to vector<2x16x16xf32>
    %3 = arith.subf %2, %1 : vector<2x16x16xf32>
    %cst_3 = arith.constant 5.000000e-01 : f32
    %4 = vector.broadcast %cst_3 : f32 to vector<2x16x16xf32>
    %5 = arith.mulf %3, %4 : vector<2x16x16xf32>
    %6 = tpu.iota {dimensions = array<i32: 2>} : vector<2x16x16xi32>
    %7 = vector.extract_strided_slice %5 {offsets = [0, 0, 0], sizes = [2, 16, 1], strides = [1, 1, 1]} : vector<2x16x16xf32> to vector<2x16x1xf32>
    %8 = vector.extract_strided_slice %5 {offsets = [0, 0, 15], sizes = [2, 16, 1], strides = [1, 1, 1]} : vector<2x16x16xf32> to vector<2x16x1xf32>
    %c15_i32 = arith.constant 15 : i32
    %9 = tpu.dynamic_rotate %5 by %c15_i32 dim 2 : vector<2x16x16xf32>, i32 -> vector<2x16x16xf32>
    %c14_i32 = arith.constant 14 : i32
    %10 = vector.broadcast %c14_i32 : i32 to vector<2x16x16xi32>
    %11 = arith.cmpi sle, %6, %10 : vector<2x16x16xi32>
    %12 = vector.shape_cast %8 : vector<2x16x1xf32> to vector<2x16x1xf32>
    %13 = vector.broadcast %12 : vector<2x16x1xf32> to vector<2x16x16xf32>
    %14 = arith.select %11, %9, %13 : vector<2x16x16xi1>, vector<2x16x16xf32>
    %c1_i32 = arith.constant 1 : i32
    %15 = tpu.dynamic_rotate %5 by %c1_i32 dim 2 : vector<2x16x16xf32>, i32 -> vector<2x16x16xf32>
    %c1_i32_4 = arith.constant 1 : i32
    %16 = vector.broadcast %c1_i32_4 : i32 to vector<2x16x16xi32>
    %17 = arith.cmpi sge, %6, %16 : vector<2x16x16xi32>
    %18 = vector.shape_cast %7 : vector<2x16x1xf32> to vector<2x16x1xf32>
    %19 = vector.broadcast %18 : vector<2x16x1xf32> to vector<2x16x16xf32>
    %20 = arith.select %17, %15, %19 : vector<2x16x16xi1>, vector<2x16x16xf32>
    %21 = arith.addf %5, %14 : vector<2x16x16xf32>
    %22 = arith.addf %21, %20 : vector<2x16x16xf32>
    %c14_i32_5 = arith.constant 14 : i32
    %23 = tpu.dynamic_rotate %5 by %c14_i32_5 dim 2 : vector<2x16x16xf32>, i32 -> vector<2x16x16xf32>
    %c13_i32 = arith.constant 13 : i32
    %24 = vector.broadcast %c13_i32 : i32 to vector<2x16x16xi32>
    %25 = arith.cmpi sle, %6, %24 : vector<2x16x16xi32>
    %26 = vector.shape_cast %8 : vector<2x16x1xf32> to vector<2x16x1xf32>
    %27 = vector.broadcast %26 : vector<2x16x1xf32> to vector<2x16x16xf32>
    %28 = arith.select %25, %23, %27 : vector<2x16x16xi1>, vector<2x16x16xf32>
    %c2_i32 = arith.constant 2 : i32
    %29 = tpu.dynamic_rotate %5 by %c2_i32 dim 2 : vector<2x16x16xf32>, i32 -> vector<2x16x16xf32>
    %c2_i32_6 = arith.constant 2 : i32
    %30 = vector.broadcast %c2_i32_6 : i32 to vector<2x16x16xi32>
    %31 = arith.cmpi sge, %6, %30 : vector<2x16x16xi32>
    %32 = vector.shape_cast %7 : vector<2x16x1xf32> to vector<2x16x1xf32>
    %33 = vector.broadcast %32 : vector<2x16x1xf32> to vector<2x16x16xf32>
    %34 = arith.select %31, %29, %33 : vector<2x16x16xi1>, vector<2x16x16xf32>
    %35 = arith.addf %22, %28 : vector<2x16x16xf32>
    %36 = arith.addf %35, %34 : vector<2x16x16xf32>
    %c0_7 = arith.constant 0 : index
    %c2 = arith.constant 2 : index
    %c0_8 = arith.constant 0 : index
    %37 = vector.load %arg4[%c0_7, %c2, %c0_8] : memref<2x20x16xf32, #tpu.memory_space<vmem>>, vector<2x16x16xf32>
    tpu.vector_store %arg4[%c0_7, %c2, %c0_8], %36 {strides = array<i32>} : memref<2x20x16xf32, #tpu.memory_space<vmem>>, vector<2x16x16xf32>,
    %38 = vector.extract_strided_slice %36 {offsets = [0, 0, 0], sizes = [2, 1, 16], strides = [1, 1, 1]} : vector<2x16x16xf32> to vector<2x1x16xf32>
    %39 = vector.extract_strided_slice %36 {offsets = [0, 15, 0], sizes = [2, 1, 16], strides = [1, 1, 1]} : vector<2x16x16xf32> to vector<2x1x16xf32>
    %40 = vector.shape_cast %38 : vector<2x1x16xf32> to vector<2x1x16xf32>
    %41 = vector.broadcast %40 : vector<2x1x16xf32> to vector<2x2x16xf32>
    %c0_9 = arith.constant 0 : index
    %c0_10 = arith.constant 0 : index
    %c0_11 = arith.constant 0 : index
    %42 = vector.load %arg4[%c0_9, %c0_10, %c0_11] : memref<2x20x16xf32, #tpu.memory_space<vmem>>, vector<2x2x16xf32>
    tpu.vector_store %arg4[%c0_9, %c0_10, %c0_11], %41 {strides = array<i32>} : memref<2x20x16xf32, #tpu.memory_space<vmem>>, vector<2x2x16xf32>,
    %43 = vector.shape_cast %39 : vector<2x1x16xf32> to vector<2x1x16xf32>
    %44 = vector.broadcast %43 : vector<2x1x16xf32> to vector<2x2x16xf32>
    %c0_12 = arith.constant 0 : index
    %c18 = arith.constant 18 : index
    %c0_13 = arith.constant 0 : index
    %45 = vector.load %arg4[%c0_12, %c18, %c0_13] : memref<2x20x16xf32, #tpu.memory_space<vmem>>, vector<2x2x16xf32>
    tpu.vector_store %arg4[%c0_12, %c18, %c0_13], %44 {strides = array<i32>} : memref<2x20x16xf32, #tpu.memory_space<vmem>>, vector<2x2x16xf32>,
    %c0_14 = arith.constant 0 : index
    %c0_15 = arith.constant 0 : index
    %c0_16 = arith.constant 0 : index
    %46 = vector.load %arg4[%c0_14, %c0_15, %c0_16] : memref<2x20x16xf32, #tpu.memory_space<vmem>>, vector<2x16x16xf32>
    %c0_17 = arith.constant 0 : index
    %c1 = arith.constant 1 : index
    %c0_18 = arith.constant 0 : index
    %47 = vector.load %arg4[%c0_17, %c1, %c0_18] : memref<2x20x16xf32, #tpu.memory_space<vmem>>, vector<2x16x16xf32>
    %48 = arith.addf %46, %47 : vector<2x16x16xf32>
    %c0_19 = arith.constant 0 : index
    %c2_20 = arith.constant 2 : index
    %c0_21 = arith.constant 0 : index
    %49 = vector.load %arg4[%c0_19, %c2_20, %c0_21] : memref<2x20x16xf32, #tpu.memory_space<vmem>>, vector<2x16x16xf32>
    %50 = arith.addf %48, %49 : vector<2x16x16xf32>
    %c0_22 = arith.constant 0 : index
    %c3 = arith.constant 3 : index
    %c0_23 = arith.constant 0 : index
    %51 = vector.load %arg4[%c0_22, %c3, %c0_23] : memref<2x20x16xf32, #tpu.memory_space<vmem>>, vector<2x16x16xf32>
    %52 = arith.addf %50, %51 : vector<2x16x16xf32>
    %c0_24 = arith.constant 0 : index
    %c4 = arith.constant 4 : index
    %c0_25 = arith.constant 0 : index
    %53 = vector.load %arg4[%c0_24, %c4, %c0_25] : memref<2x20x16xf32, #tpu.memory_space<vmem>>, vector<2x16x16xf32>
    %54 = arith.addf %52, %53 : vector<2x16x16xf32>
    %cst_26 = arith.constant 0.000000e+00 : f32
    %cst_27 = arith.constant 1.000000e+00 : f32
    %55 = vector.broadcast %cst_26 : f32 to vector<2x16x16xf32>
    %56 = arith.maximumf %55, %54 : vector<2x16x16xf32>
    %57 = vector.broadcast %cst_27 : f32 to vector<2x16x16xf32>
    %58 = arith.minimumf %57, %56 : vector<2x16x16xf32>
    %cst_28 = arith.constant 2.000000e+00 : f32
    %59 = vector.broadcast %cst_28 : f32 to vector<2x16x16xf32>
    %60 = arith.mulf %59, %58 : vector<2x16x16xf32>
    %cst_29 = arith.constant 1.000000e+00 : f32
    %61 = vector.broadcast %cst_29 : f32 to vector<2x16x16xf32>
    %62 = arith.subf %61, %60 : vector<2x16x16xf32>
    %c0_30 = arith.constant 0 : index
    %c0_31 = arith.constant 0 : index
    %c0_32 = arith.constant 0 : index
    %c0_33 = arith.constant 0 : index
    %63 = vector.load %arg3[%c0_30, %c0_31, %c0_32, %c0_33] : memref<1x2x16x16xf32, #tpu.memory_space<vmem>>, vector<1x2x16x16xf32>
    %64 = vector.shape_cast %63 : vector<1x2x16x16xf32> to vector<2x16x16xf32>
    %65 = vector.shape_cast %62 : vector<2x16x16xf32> to vector<1x2x16x16xf32>
    tpu.vector_store %arg3[%c0_30, %c0_31, %c0_32, %c0_33], %65 {strides = array<i32>} : memref<1x2x16x16xf32, #tpu.memory_space<vmem>>, vector<1x2x16x16xf32>,
    return
  }
  func.func @transform_0(%arg0: i32, %arg1: i32) -> (i32, i32, i32, i32) {
    %c0_i32 = arith.constant 0 : i32
    %c0_i32_0 = arith.constant 0 : i32
    %c0_i32_1 = arith.constant 0 : i32
    return %arg0, %arg1, %c0_i32, %c0_i32_0 : i32, i32, i32, i32
  }
  func.func @transform_1(%arg0: i32, %arg1: i32) -> (i32, i32, i32, i32) {
    %c0_i32 = arith.constant 0 : i32
    %c0_i32_0 = arith.constant 0 : i32
    %c0_i32_1 = arith.constant 0 : i32
    return %arg0, %arg1, %c0_i32, %c0_i32_0 : i32, i32, i32, i32
  }
}

</mosaic_0001>

<llo_original>
// kernel: tpu_custom_call.1
$region0: #{tpu_custom_call.1}
  #allocation0 [shape = 'u32[]', space=smem, size = 0x4, offset = 0x4, fixed_abs, tag = 'smem constant byte address 0x4 - core index']
  #allocation1 [shape = 'u32[144,128]{1,0:T(1,128)}', space=vmem, size = 0x12000, scoped, tag = 'internal scratch']
  #allocation2 [shape = 'f32[2,20,16]{2,1,0:T(8,128)}', space=vmem, size = 0x6000, scoped, tag = 'scratch operand']
  %s0 = inlined_call_operand.hbm [shape: f32[2,4,16,16], index: 0, kind: input, shape index: {}]
  %s1 = inlined_call_operand.hbm [shape: f32[2,4,16,16], index: 1, kind: output, shape index: {}]
  %s2 = sld [smem:[#allocation0]]
  $region41: #{tpu_custom_call.1} parent=0
    _
  %s4 = ssub.s32 1, %s2
  %s5 = scalar_select 0, %s4, %s2
  $region1: #{tpu_custom_call.1} parent=0
    #allocation3 [shape = 'u8[32768]{0}', space=vmem, size = 0x8000, scoped, tag = 'input window, operand 0']
    #allocation4 [shape = 's32[2]{0}', space=sflag, size = 0x8, scoped, tag = 'scoped memory for tpu_custom_call.1']
    #allocation5 [shape = 's32[2]{0}', space=sflag, size = 0x8, scoped, tag = 'scoped memory for tpu_custom_call.1']
    #allocation6 [shape = 'u8[32768]{0}', space=vmem, size = 0x8000, scoped, tag = 'output window, operand 0']
    %6 = vsyncpa [#allocation4], 0
    %s7 = scalar_lea.sflag [#allocation4], 1
    %8 = vsyncpa %s7, 0
    %9 = vsyncpa [#allocation5], 0
    %s10 = scalar_lea.sflag [#allocation5], 1
    %11 = vsyncpa %s10, 0
    loop: start=0, step=1, limit=6
    $region2: #{tpu_custom_call.1} parent=1 // loop_pre_header
      _
    $region3: #{tpu_custom_call.1} parent=1 // loop_header
      %s13 = sphi 0, %s17
      %p14 = scmp.ge.s32.totalorder %s13, 6
      %s20 = sphi 0, %s32
      %s21 = sphi 0, %s28
      %s22 = sphi 0, %s20
      %s23 = sphi 0, %s21
      %s24 = sphi 0, %s22
      %s25 = sphi 0, %s23
      %s37 = sphi 0, %s39
      %s40 = sphi 0, %s37
      %s41 = sphi 0, %s40
      %s57 = sphi 0, %s41
      %s65 = sphi 0, %s67
      %s68 = sphi 0, %s65
      %s69 = sphi 0, %s68
      %s85 = sphi 0, %s69
    $region4: #{tpu_custom_call.1} parent=1 // loop_header_branch
      %16 = sbr.rel (%p14) target = $region8
    $region5: #{tpu_custom_call.1} parent=1 // loop_body
      %s18 = ssub.s32 %s13, 1
      %s19 = ssub.s32 %s13, 2
      %s26 = sadd.s32 1, %s21
      %p27 = scmp.ge.s32.totalorder %s26, 2
      %s28 = scalar_select %p27, 0, %s26
      %s29 = sadd.s32 1, %s20
      %s30 = scalar_select %p27, %s29, %s20
      %p31 = scmp.ge.s32.totalorder %s30, 2
      %s32 = scalar_select %p31, 0, %s30
      %s33 = ssub.s32 %s20, %s32
      %s34 = ssub.s32 %s21, %s28
      %s35 = sor.u32 %s33, %s34
      %p36 = scmp.eq.s32.totalorder %s35, 0
      %s38 = sadd.s32 %s37, 1
      %s39 = scalar_select %p36, %s37, %s38
      %p42 = pneg %p36
      %p43 = scmp.eq.s32.totalorder %s13, 3
      %p44 = por %p42, %p43
      %p45 = scmp.ne.s32.totalorder %s37, %s40
      %p46 = scmp.eq.s32.totalorder %s13, 0
      %p47 = por %p45, %p46
      %p48 = scmp.ne.s32.totalorder %s37, %s40
      %p49 = scmp.eq.s32.totalorder %s18, 3
      %p50 = por %p48, %p49
      %p51 = scmp.ne.s32.totalorder %s40, %s41
      %p52 = scmp.eq.s32.totalorder %s18, 0
      %p53 = por %p51, %p52
      %p54 = scmp.ne.s32.totalorder %s40, %s41
      %p55 = scmp.eq.s32.totalorder %s19, 3
      %p56 = por %p54, %p55
      %p58 = scmp.ne.s32.totalorder %s41, %s57
      %p59 = scmp.eq.s32.totalorder %s19, 0
      %p60 = por %p58, %p59
      %s61 = ssub.s32 %s20, %s32
      %s62 = ssub.s32 %s21, %s28
      %s63 = sor.u32 %s61, %s62
      %p64 = scmp.eq.s32.totalorder %s63, 0
      %s66 = sadd.s32 %s65, 1
      %s67 = scalar_select %p64, %s65, %s66
      %p70 = pneg %p64
      %p71 = scmp.eq.s32.totalorder %s13, 3
      %p72 = por %p70, %p71
      %p73 = scmp.ne.s32.totalorder %s65, %s68
      %p74 = scmp.eq.s32.totalorder %s13, 0
      %p75 = por %p73, %p74
      %p76 = scmp.ne.s32.totalorder %s65, %s68
      %p77 = scmp.eq.s32.totalorder %s18, 3
      %p78 = por %p76, %p77
      %p79 = scmp.ne.s32.totalorder %s68, %s69
      %p80 = scmp.eq.s32.totalorder %s18, 0
      %p81 = por %p79, %p80
      %p82 = scmp.ne.s32.totalorder %s68, %s69
      %p83 = scmp.eq.s32.totalorder %s19, 3
      %p84 = por %p82, %p83
      %p86 = scmp.ne.s32.totalorder %s69, %s85
      %p87 = scmp.eq.s32.totalorder %s19, 0
      %p88 = por %p86, %p87
      %p89 = scmp.le.s32.totalorder 1, %s13
      %p90 = scmp.lt.s32.totalorder %s13, 5
      %p91 = pnand %p89, %p90
      %p92 = pneg %p91
      // Predicated region
      $region9: #{tpu_custom_call.1} parent=5 // pred_check
        _
      $region10: #{tpu_custom_call.1} parent=5 // pred_check_branch
        %94 = sbr.rel (%p91) target = $region12
      $region11: #{tpu_custom_call.1} parent=5 // pred_region
        %s95 = ssub.s32 %s13, 1
      $region12: #{tpu_custom_call.1} parent=5 // pred_fallthru
        _
      %p96 = scmp.lt.s32.totalorder %s13, 4
      // Predicated region
      $region13: #{tpu_custom_call.1} parent=5 // pred_check
        %p97 = pneg %p96
      $region14: #{tpu_custom_call.1} parent=5 // pred_check_branch
        %99 = sbr.rel (%p97) target = $region16
      $region15: #{tpu_custom_call.1} parent=5 // pred_region
        // Predicated region
        $region17: #{tpu_custom_call.1} parent=15 // pred_check
          %p100 = pneg %p47
        $region18: #{tpu_custom_call.1} parent=15 // pred_check_branch
          %102 = sbr.rel (%p100) target = $region20
        $region19: #{tpu_custom_call.1} parent=15 // pred_region
          %s103 = sand.u32 %s37, 1
          %s104 = scalar_lea.sflag [#allocation4], %s103
          %s105 = sand.u32 %s37, 1
          %s106 = smul.addr %s105, 32
          %s107 = scalar_lea.vmem [#allocation3], %s106
          %s108 = smul.u32 2, %s21
          %s110 = ssub.s32 512, 512
          %111 = vsyncadd %s104, %s110
          %s112 = smul.addr %s108, 2
          %s113 = smul.addr %s20, 8
          %s114 = sadd.s32 %s112, %s113
          %s115 = smul.addr %s114, 128
          %s116 = scalar_lea.hbm %s0, %s115
          %s117 = sshll.u32 %s107, 4
          %s118 = int_to_ptr.vmem [resolvable:$true] %s117
          %123 = dma.hbm_to_vmem [thread:$0]  %s116, 512, %s118, %s104, 128, 128, 8
        $region20: #{tpu_custom_call.1} parent=15 // pred_fallthru
          _
      $region16: #{tpu_custom_call.1} parent=5 // pred_fallthru
        _
      %p124 = scmp.le.s32.totalorder 1, %s13
      %p125 = scmp.lt.s32.totalorder %s13, 5
      %p126 = pnand %p124, %p125
      %p127 = pneg %p126
      // Predicated region
      $region21: #{tpu_custom_call.1} parent=5 // pred_check
        _
      $region22: #{tpu_custom_call.1} parent=5 // pred_check_branch
        %129 = sbr.rel (%p126) target = $region24
      $region23: #{tpu_custom_call.1} parent=5 // pred_region
        %s130 = ssub.s32 %s13, 1
        %s131 = sand.u32 %s40, 1
        %s132 = scalar_lea.sflag [#allocation4], %s131
        %s133 = sand.u32 %s40, 1
        %s134 = smul.addr %s133, 32
        %s135 = scalar_lea.vmem [#allocation3], %s134
        // Predicated region
        $region25: #{tpu_custom_call.1} parent=23 // pred_check
          %p136 = pneg %p53
        $region26: #{tpu_custom_call.1} parent=23 // pred_check_branch
          %138 = sbr.rel (%p136) target = $region28
        $region27: #{tpu_custom_call.1} parent=23 // pred_region
          %139 = dma.done %s132, 512
        $region28: #{tpu_custom_call.1} parent=23 // pred_fallthru
          _
        %s140 = sand.u32 %s40, 1
        %s141 = scalar_lea.sflag [#allocation4], %s140
        %s142 = sand.u32 %s40, 1
        %s143 = smul.addr %s142, 32
        %s144 = scalar_lea.vmem [#allocation3], %s143
        %p145 = pneg %p53
        %p146 = pneg %p50
        %p147 = pneg %p81
        %p148 = pneg %p78
        %s149 = sand.u32 %s68, 1
        %s150 = scalar_lea.sflag [#allocation5], %s149
        %s151 = sand.u32 %s68, 1
        %s152 = smul.addr %s151, 32
        %s153 = scalar_lea.vmem [#allocation6], %s152
        %s154 = smul.u32 2, %s23
        %s155 = smul.u32 2, %s23
        %v156 = vld [vmem:[%s135] sm:$0xff]
        %v157 = vld [vmem:[%s135 + $0x8] sm:$0xff]
        %v158 = vld [vmem:[%s135 + $0x10] sm:$0xff]
        %v159 = vld [vmem:[%s135 + $0x18] sm:$0xff]
        %v160 = vsub.f32 1.0, %v156
        %v161 = vsub.f32 1.0, %v157
        %v162 = vsub.f32 1.0, %v158
        %v163 = vsub.f32 1.0, %v159
        %v164 = vmul.f32 %v160, 0.5
        %v165 = vmul.f32 %v161, 0.5
        %v166 = vmul.f32 %v162, 0.5
        %v167 = vmul.f32 %v163, 0.5
        %v168 = vlaneseq
        %v169 = vand.u32 %v168, 127
        %vm170 = vcmask 1047680
        %171 = vrot.lane.b32.xlu0 %v164, 16
        %v172 = vpop.permute.xlu0 %171
        %v173 = vsel %vm170, %v172, %v164
        %174 = vrot.lane.b32.xlu0 %v165, 16
        %v175 = vpop.permute.xlu0 %174
        %v176 = vsel %vm170, %v175, %v165
        %177 = vrot.lane.b32.xlu0 %v166, 16
        %v178 = vpop.permute.xlu0 %177
        %v179 = vsel %vm170, %v178, %v166
        %180 = vrot.lane.b32.xlu0 %v167, 16
        %v181 = vpop.permute.xlu0 %180
        %v182 = vsel %vm170, %v181, %v167
        %183 = vrot.lane.b32.xlu0 %v173, 16
        %v184 = vpop.permute.xlu0 %183
        %185 = vrot.lane.b32.xlu0 %v176, 16
        %v186 = vpop.permute.xlu0 %185
        %187 = vrot.lane.b32.xlu0 %v179, 16
        %v188 = vpop.permute.xlu0 %187
        %189 = vrot.lane.b32.xlu0 %v182, 16
        %v190 = vpop.permute.xlu0 %189
        %v191 = vsel %vm170, %v184, %v164
        %v192 = vsel %vm170, %v186, %v165
        %v193 = vsel %vm170, %v188, %v166
        %v194 = vsel %vm170, %v190, %v167
        %vm195 = vcmp.le.s32.totalorder %v169, 14
        %197 = vset.pattern.permute.xlu0 15
        %198 = vperm.xlu0 %197, %v164
        %v199 = vpop.permute.xlu0 %198
        %202 = vset.pattern.permute.xlu0 15
        %203 = vperm.xlu0 %202, %v165
        %v204 = vpop.permute.xlu0 %203
        %207 = vset.pattern.permute.xlu0 15
        %208 = vperm.xlu0 %207, %v166
        %v209 = vpop.permute.xlu0 %208
        %212 = vset.pattern.permute.xlu0 15
        %213 = vperm.xlu0 %212, %v167
        %v214 = vpop.permute.xlu0 %213
        %220 = vrot.lane.b32.xlu0 %v191, 127
        %v221 = vpop.permute.xlu0 %220
        %222 = vrot.lane.b32.xlu0 %v192, 127
        %v223 = vpop.permute.xlu0 %222
        %224 = vrot.lane.b32.xlu0 %v193, 127
        %v225 = vpop.permute.xlu0 %224
        %226 = vrot.lane.b32.xlu0 %v194, 127
        %v227 = vpop.permute.xlu0 %226
        %v232 = vsel %vm195, %v221, %v199
        %v233 = vsel %vm195, %v223, %v204
        %v234 = vsel %vm195, %v225, %v209
        %v235 = vsel %vm195, %v227, %v214
        %vm236 = vcmp.ge.s32.totalorder %v169, 1
        %237 = vset.pattern.permute.xlu0 0
        %238 = vperm.xlu0 %237, %v164
        %v239 = vpop.permute.xlu0 %238
        %241 = vset.pattern.permute.xlu0 0
        %242 = vperm.xlu0 %241, %v165
        %v243 = vpop.permute.xlu0 %242
        %245 = vset.pattern.permute.xlu0 0
        %246 = vperm.xlu0 %245, %v166
        %v247 = vpop.permute.xlu0 %246
        %249 = vset.pattern.permute.xlu0 0
        %250 = vperm.xlu0 %249, %v167
        %v251 = vpop.permute.xlu0 %250
        %253 = vrot.lane.b32.xlu0 %v191, 113
        %v254 = vpop.permute.xlu0 %253
        %255 = vrot.lane.b32.xlu0 %v192, 113
        %v256 = vpop.permute.xlu0 %255
        %257 = vrot.lane.b32.xlu0 %v193, 113
        %v258 = vpop.permute.xlu0 %257
        %259 = vrot.lane.b32.xlu0 %v194, 113
        %v260 = vpop.permute.xlu0 %259
        %v265 = vsel %vm236, %v254, %v239
        %v266 = vsel %vm236, %v256, %v243
        %v267 = vsel %vm236, %v258, %v247
        %v268 = vsel %vm236, %v260, %v251
        %v269 = vadd.f32 %v164, %v232
        %v270 = vadd.f32 %v165, %v233
        %v271 = vadd.f32 %v166, %v234
        %v272 = vadd.f32 %v167, %v235
        %v273 = vadd.f32 %v269, %v265
        %v274 = vadd.f32 %v270, %v266
        %v275 = vadd.f32 %v271, %v267
        %v276 = vadd.f32 %v272, %v268
        %vm277 = vcmp.le.s32.totalorder %v169, 13
        %278 = vrot.lane.b32.xlu0 %v191, 126
        %v279 = vpop.permute.xlu0 %278
        %280 = vrot.lane.b32.xlu0 %v192, 126
        %v281 = vpop.permute.xlu0 %280
        %282 = vrot.lane.b32.xlu0 %v193, 126
        %v283 = vpop.permute.xlu0 %282
        %284 = vrot.lane.b32.xlu0 %v194, 126
        %v285 = vpop.permute.xlu0 %284
        %v290 = vsel %vm277, %v279, %v199
        %v291 = vsel %vm277, %v281, %v204
        %v292 = vsel %vm277, %v283, %v209
        %v293 = vsel %vm277, %v285, %v214
        %vm294 = vcmp.ge.s32.totalorder %v169, 2
        %295 = vrot.lane.b32.xlu0 %v191, 114
        %v296 = vpop.permute.xlu0 %295
        %297 = vrot.lane.b32.xlu0 %v192, 114
        %v298 = vpop.permute.xlu0 %297
        %299 = vrot.lane.b32.xlu0 %v193, 114
        %v300 = vpop.permute.xlu0 %299
        %301 = vrot.lane.b32.xlu0 %v194, 114
        %v302 = vpop.permute.xlu0 %301
        %v307 = vsel %vm294, %v296, %v239
        %v308 = vsel %vm294, %v298, %v243
        %v309 = vsel %vm294, %v300, %v247
        %v310 = vsel %vm294, %v302, %v251
        %v311 = vadd.f32 %v273, %v290
        %v312 = vadd.f32 %v274, %v291
        %v313 = vadd.f32 %v275, %v292
        %v314 = vadd.f32 %v276, %v293
        %v315 = vadd.f32 %v311, %v307
        %v316 = vadd.f32 %v312, %v308
        %v317 = vadd.f32 %v313, %v309
        %v318 = vadd.f32 %v314, %v310
        %vm319 = vcmask 130048
        %320 = vst.msk [vmem:[#allocation2 + $0x2] sm:$0xff] %vm319, %v315
        %321 = vst.msk [vmem:[#allocation2 + $0xa] sm:$0xff] %vm319, %v316
        %322 = vst.msk [vmem:[#allocation2 + $0x1a] sm:$0xff] %vm319, %v317
        %323 = vst.msk [vmem:[#allocation2 + $0x22] sm:$0xff] %vm319, %v318
        %v324 = vlaneseq
        %v325 = vshrl.u32 %v324, 7
        %v326 = vsub.s32 0, %v325
        %v327 = vrot.slane %v315, %v326
        %v328 = vlaneseq
        %v329 = vshrl.u32 %v328, 7
        %v330 = vsub.s32 0, %v329
        %v331 = vrot.slane %v317, %v330
        %vm332 = vcmask 123904
        %333 = vst.msk [vmem:[#allocation2] sm:$0x3] %vm332, %v327
        %334 = vst.msk [vmem:[#allocation2 + $0x18] sm:$0x3] %vm332, %v331
        %v335 = vlaneseq
        %v336 = vshrl.u32 %v335, 7
        %v337 = vsub.s32 7, %v336
        %v338 = vrot.slane %v316, %v337
        %v339 = vlaneseq
        %v340 = vshrl.u32 %v339, 7
        %v341 = vsub.s32 7, %v340
        %v342 = vrot.slane %v318, %v341
        %343 = vst.msk [vmem:[#allocation2 + $0x12] sm:$0x3] %vm332, %v338
        %344 = vst.msk [vmem:[#allocation2 + $0x2a] sm:$0x3] %vm332, %v342
        %v345 = vld [vmem:[#allocation2] sm:$0xff]
        %v346 = vld [vmem:[#allocation2 + $0x8] sm:$0xff]
        %v347 = vld [vmem:[#allocation2 + $0x18] sm:$0xff]
        %v348 = vld [vmem:[#allocation2 + $0x20] sm:$0xff]
        %v349 = vld [vmem:[#allocation2 + $0x1] sm:$0xff]
        %v350 = vld [vmem:[#allocation2 + $0x9] sm:$0xff]
        %v351 = vld [vmem:[#allocation2 + $0x19] sm:$0xff]
        %v352 = vld [vmem:[#allocation2 + $0x21] sm:$0xff]
        %v353 = vadd.f32 %v345, %v349
        %v354 = vadd.f32 %v346, %v350
        %v355 = vadd.f32 %v347, %v351
        %v356 = vadd.f32 %v348, %v352
        %v357 = vld [vmem:[#allocation2 + $0x2] sm:$0xff]
        %v358 = vld [vmem:[#allocation2 + $0xa] sm:$0xff]
        %v359 = vld [vmem:[#allocation2 + $0x1a] sm:$0xff]
        %v360 = vld [vmem:[#allocation2 + $0x22] sm:$0xff]
        %v361 = vadd.f32 %v353, %v357
        %v362 = vadd.f32 %v354, %v358
        %v363 = vadd.f32 %v355, %v359
        %v364 = vadd.f32 %v356, %v360
        %v365 = vld [vmem:[#allocation2 + $0x3] sm:$0xff]
        %v366 = vld [vmem:[#allocation2 + $0xb] sm:$0xff]
        %v367 = vld [vmem:[#allocation2 + $0x1b] sm:$0xff]
        %v368 = vld [vmem:[#allocation2 + $0x23] sm:$0xff]
        %v369 = vadd.f32 %v361, %v365
        %v370 = vadd.f32 %v362, %v366
        %v371 = vadd.f32 %v363, %v367
        %v372 = vadd.f32 %v364, %v368
        %v373 = vld [vmem:[#allocation2 + $0x4] sm:$0xff]
        %v374 = vld [vmem:[#allocation2 + $0xc] sm:$0xff]
        %v375 = vld [vmem:[#allocation2 + $0x1c] sm:$0xff]
        %v376 = vld [vmem:[#allocation2 + $0x24] sm:$0xff]
        %v377 = vadd.f32 %v369, %v373
        %v378 = vadd.f32 %v370, %v374
        %v379 = vadd.f32 %v371, %v375
        %v380 = vadd.f32 %v372, %v376
        %v381 = vmax.f32 %v377, 0.0
        %v382 = vmax.f32 %v378, 0.0
        %v383 = vmax.f32 %v379, 0.0
        %v384 = vmax.f32 %v380, 0.0
        %v385 = vmin.f32 %v381, 1.0
        %v386 = vmin.f32 %v382, 1.0
        %v387 = vmin.f32 %v383, 1.0
        %v388 = vmin.f32 %v384, 1.0
        %v389 = vmul.f32 %v385, 2.0
        %v390 = vmul.f32 %v386, 2.0
        %v391 = vmul.f32 %v387, 2.0
        %v392 = vmul.f32 %v388, 2.0
        %v393 = vsub.f32 1.0, %v389
        %v394 = vsub.f32 1.0, %v390
        %v395 = vsub.f32 1.0, %v391
        %v396 = vsub.f32 1.0, %v392
        %397 = vst.msk [vmem:[%s153] sm:$0xff] %vm319, %v393
        %398 = vst.msk [vmem:[%s153 + $0x8] sm:$0xff] %vm319, %v394
        %399 = vst.msk [vmem:[%s153 + $0x10] sm:$0xff] %vm319, %v395
        %400 = vst.msk [vmem:[%s153 + $0x18] sm:$0xff] %vm319, %v396
        %s401 = sand.u32 %s68, 1
        %s402 = scalar_lea.sflag [#allocation5], %s401
        %s403 = sand.u32 %s68, 1
        %s404 = smul.addr %s403, 32
        %s405 = scalar_lea.vmem [#allocation6], %s404
        // Predicated region
        $region29: #{tpu_custom_call.1} parent=23 // pred_check
          %p406 = pneg %p78
        $region30: #{tpu_custom_call.1} parent=23 // pred_check_branch
          %408 = sbr.rel (%p406) target = $region32
        $region31: #{tpu_custom_call.1} parent=23 // pred_region
          %s409 = smul.u32 2, %s23
          %s411 = ssub.s32 512, 512
          %412 = vsyncadd %s402, %s411
          %s413 = smul.addr %s409, 2
          %s414 = smul.addr %s22, 8
          %s415 = sadd.s32 %s413, %s414
          %s416 = smul.addr %s415, 128
          %s417 = scalar_lea.hbm %s1, %s416
          %s418 = sshll.u32 %s405, 4
          %s419 = int_to_ptr.vmem [resolvable:$true] %s418
          %424 = dma.vmem_to_hbm [thread:$0]  %s419, 512, %s417, %s402, 128, 128, 8
        $region32: #{tpu_custom_call.1} parent=23 // pred_fallthru
          _
      $region24: #{tpu_custom_call.1} parent=5 // pred_fallthru
        _
      %p425 = scmp.le.s32.totalorder 2, %s13
      // Predicated region
      $region33: #{tpu_custom_call.1} parent=5 // pred_check
        %p426 = pneg %p425
      $region34: #{tpu_custom_call.1} parent=5 // pred_check_branch
        %428 = sbr.rel (%p426) target = $region36
      $region35: #{tpu_custom_call.1} parent=5 // pred_region
        %s429 = ssub.s32 %s13, 2
        // Predicated region
        $region37: #{tpu_custom_call.1} parent=35 // pred_check
          %p430 = pneg %p84
        $region38: #{tpu_custom_call.1} parent=35 // pred_check_branch
          %432 = sbr.rel (%p430) target = $region40
        $region39: #{tpu_custom_call.1} parent=35 // pred_region
          %s433 = sand.u32 %s69, 1
          %s434 = scalar_lea.sflag [#allocation5], %s433
          %s435 = sand.u32 %s69, 1
          %s436 = smul.addr %s435, 32
          %s437 = scalar_lea.vmem [#allocation6], %s436
          %438 = dma.done %s434, 512
        $region40: #{tpu_custom_call.1} parent=35 // pred_fallthru
          _
      $region36: #{tpu_custom_call.1} parent=5 // pred_fallthru
        _
    $region6: #{tpu_custom_call.1} parent=1 // loop_footer
      %s17 = sadd.s32 1, %s13
    $region7: #{tpu_custom_call.1} parent=1 // loop_footer_branch
      %12 = sbr.rel target = $region3
    $region8: #{tpu_custom_call.1} parent=1 // loop_exit
      _
    %439 = vsyncpa [#allocation4], 1
    %s440 = scalar_lea.sflag [#allocation4], 1
    %441 = vsyncpa %s440, 1
    %442 = vsyncpa [#allocation5], 1
    %s443 = scalar_lea.sflag [#allocation5], 1
    %444 = vsyncpa %s443, 1

</llo_original>
